<compile_context>
chip_gen: v7x
topology: tpu7x:2x2x1
jax: 0.10.0
libtpu: 0.0.40
codegen_flags: <defaults>
</compile_context>

<pallas_src>
import functools

import jax
import jax.numpy as jnp
from jax.experimental import pallas as pl
from jax.experimental.pallas import tpu as pltpu

_DEFAULT_TILE_BT = 256
_LANE = 128


def _round_up(x: int, m: int) -> int:
    return (x + m - 1) // m * m


# ---------------------------------------------------------------------------
# Kernels
# ---------------------------------------------------------------------------
def _bigram_train_kernel(idx_ref, tgt_ref, emb_ref, logits_ref, nll_ref, *,
                         v, bt_true):
    tile_bt = idx_ref.shape[0]
    v_pad = emb_ref.shape[1]
    tile = pl.program_id(0)

    idx = idx_ref[...]          # (tile_bt, 1) int32
    tgt = tgt_ref[...]          # (tile_bt, 1) int32
    emb = emb_ref[...]          # (v_pad, v_pad) f32, zero-padded

    vocab_iota = jax.lax.broadcasted_iota(jnp.int32, (tile_bt, v_pad), 1)

    # Embedding gather as a lane-dense one-hot matmul on the MXU (exact in f32:
    # exactly one 1.0 per row -> a pure row copy).
    onehot = (vocab_iota == idx).astype(jnp.float32)
    logits = jnp.dot(onehot, emb, preferred_element_type=jnp.float32)
    logits_ref[...] = logits

    # Cross-entropy without materializing log-probs or a second one-hot:
    #   nll_row = (m + log(sum exp(logits - m))) - logits[target]
    # Padded vocab columns are masked out of the max / LSE.
    valid_col = vocab_iota < v
    masked = jnp.where(valid_col, logits, jnp.float32(-1e30))
    m = jnp.max(masked, axis=-1, keepdims=True)
    lse = jnp.log(jnp.sum(jnp.exp(masked - m), axis=-1, keepdims=True))
    tgt_logit = jnp.sum(jnp.where(vocab_iota == tgt, logits, 0.0),
                        axis=-1, keepdims=True)
    nll_row = (m + lse) - tgt_logit                       # (tile_bt, 1)

    # Zero out padded rows (global row index >= true B*T).
    row_iota = (jax.lax.broadcasted_iota(jnp.int32, (tile_bt, 1), 0)
                + tile * tile_bt)
    nll_ref[...] = jnp.where(row_iota < bt_true, nll_row, 0.0)


def _bigram_infer_kernel(idx_ref, emb_ref, logits_ref):
    tile_bt = idx_ref.shape[0]
    v_pad = emb_ref.shape[1]
    vocab_iota = jax.lax.broadcasted_iota(jnp.int32, (tile_bt, v_pad), 1)
    onehot = (vocab_iota == idx_ref[...]).astype(jnp.float32)
    logits_ref[...] = jnp.dot(onehot, emb_ref[...],
                              preferred_element_type=jnp.float32)


# ---------------------------------------------------------------------------
# pallas_call wrappers
# ---------------------------------------------------------------------------
@functools.partial(jax.jit, static_argnames=("v", "bt_true", "tile_bt"))
def _bigram_train(idx_pad, tgt_pad, emb_pad, *, v, bt_true, tile_bt):
    bt_pad = idx_pad.shape[0]
    v_pad = emb_pad.shape[1]
    num_tiles = bt_pad // tile_bt

    kernel = functools.partial(_bigram_train_kernel, v=v, bt_true=bt_true)
    logits_pad, nll_rows = pl.pallas_call(
        kernel,
        grid=(num_tiles,),
        in_specs=[
            pl.BlockSpec((tile_bt, 1), lambda i: (i, 0)),        # idx
            pl.BlockSpec((tile_bt, 1), lambda i: (i, 0)),        # targets
            pl.BlockSpec((v_pad, v_pad), lambda i: (0, 0)),      # emb (resident)
        ],
        out_specs=(
            pl.BlockSpec((tile_bt, v_pad), lambda i: (i, 0)),    # logits
            pl.BlockSpec((tile_bt, 1), lambda i: (i, 0)),        # per-row NLL
        ),
        out_shape=(
            jax.ShapeDtypeStruct((bt_pad, v_pad), jnp.float32),
            jax.ShapeDtypeStruct((bt_pad, 1), jnp.float32),
        ),
        compiler_params=pltpu.CompilerParams(
            dimension_semantics=("parallel",)),
    )(idx_pad, tgt_pad, emb_pad)

    logits = logits_pad[:bt_true, :v]
    loss = jnp.sum(nll_rows) / jnp.float32(bt_true)
    return logits, loss


@functools.partial(jax.jit, static_argnames=("tile_bt",))
def _bigram_infer(idx_pad, emb_pad, *, tile_bt):
    bt_pad = idx_pad.shape[0]
    v_pad = emb_pad.shape[1]
    num_tiles = bt_pad // tile_bt
    return pl.pallas_call(
        _bigram_infer_kernel,
        grid=(num_tiles,),
        in_specs=[
            pl.BlockSpec((tile_bt, 1), lambda i: (i, 0)),
            pl.BlockSpec((v_pad, v_pad), lambda i: (0, 0)),
        ],
        out_specs=pl.BlockSpec((tile_bt, v_pad), lambda i: (i, 0)),
        out_shape=jax.ShapeDtypeStruct((bt_pad, v_pad), jnp.float32),
        compiler_params=pltpu.CompilerParams(
            dimension_semantics=("parallel",)),
    )(idx_pad, emb_pad)


# ---------------------------------------------------------------------------
# Model
# ---------------------------------------------------------------------------
class BigramLanguageModel:
    """JAX/Pallas port of the PyTorch BigramLanguageModel forward pass."""

    def __init__(self, vocab_size: int, key):
        self.vocab_size = vocab_size
        self.v_pad = _round_up(vocab_size, _LANE)
        # nn.Embedding default init: N(0, 1)
        self.token_embedding_table = jax.random.normal(
            key, (vocab_size, vocab_size), dtype=jnp.float32)
        # Lane-dense, zero-padded copy used by the kernels.
        self._emb_padded = (
            jnp.zeros((self.v_pad, self.v_pad), jnp.float32)
            .at[:vocab_size, :vocab_size].set(self.token_embedding_table))

    @staticmethod
    def _pad_rows(flat, bt):
        if bt >= _DEFAULT_TILE_BT:
            tile_bt = _DEFAULT_TILE_BT
            bt_pad = _round_up(bt, tile_bt)
        else:
            tile_bt = max(8, _round_up(bt, 8))
            bt_pad = tile_bt
        padded = jnp.zeros((bt_pad, 1), jnp.int32).at[:bt, 0].set(flat)
        return padded, tile_bt

    def forward(self, idx, targets=None):
        B, T = idx.shape
        V = self.vocab_size
        bt = B * T
        idx_flat = idx.reshape(bt).astype(jnp.int32)
        idx_pad, tile_bt = self._pad_rows(idx_flat, bt)

        if targets is None:
            # Inference path: no loss math at all.
            logits_pad = _bigram_infer(idx_pad, self._emb_padded,
                                       tile_bt=tile_bt)
            logits = logits_pad[:bt, :V].reshape(B, T, V)
            return logits, None

        tgt_flat = targets.reshape(bt).astype(jnp.int32)
        tgt_pad, _ = self._pad_rows(tgt_flat, bt)
        logits, loss = _bigram_train(idx_pad, tgt_pad, self._emb_padded,
                                     v=V, bt_true=bt, tile_bt=tile_bt)
        # PyTorch returns the (B*T, C) view of logits when targets are supplied.
        return logits, loss

    __call__ = forward

    # TODO(synk): generate() (autoregressive multinomial sampling loop) is host-side
    # control flow around the forward pass; not implemented as a Pallas kernel.


# ---------------------------------------------------------------------------
# Reference + test
# ---------------------------------------------------------------------------
def _reference(idx, targets, emb):
    logits = emb[idx]                                   # (B, T, V)
    B, T, V = logits.shape
    flat = logits.reshape(B * T, V)
    tflat = targets.reshape(B * T)
    logp = jax.nn.log_softmax(flat, axis=-1)
    loss = -jnp.mean(logp[jnp.arange(B * T), tflat])
    return flat, loss


if __name__ == "__main__":
    key = jax.random.PRNGKey(0)
    k_emb, k_idx, k_tgt, k_idx2, k_tgt2 = jax.random.split(key, 5)

    vocab_size = 65   # typical char-level vocab from the lecture
    model = BigramLanguageModel(vocab_size, k_emb)

    # --- small shape (single tile, padded rows) ---
    B, T = 2, 8
    idx = jax.random.randint(k_idx, (B, T), 0, vocab_size, dtype=jnp.int32)
    targets = jax.random.randint(k_tgt, (B, T), 0, vocab_size, dtype=jnp.int32)

    logits, loss = model(idx, targets)
    jax.block_until_ready((logits, loss))

    ref_logits, ref_loss = _reference(idx, targets, model.token_embedding_table)
    assert logits.shape == (B * T, vocab_size)
    assert jnp.allclose(logits, ref_logits, atol=1e-5)
    assert jnp.allclose(loss, ref_loss, atol=1e-5)

    # --- multi-tile shape (exercises grid, resident emb block, row masking) ---
    B2, T2 = 5, 100   # BT = 500 -> 2 tiles of 256, last tile partially masked
    idx2 = jax.random.randint(k_idx2, (B2, T2), 0, vocab_size, dtype=jnp.int32)
    tgt2 = jax.random.randint(k_tgt2, (B2, T2), 0, vocab_size, dtype=jnp.int32)
    logits2, loss2 = model(idx2, tgt2)
    jax.block_until_ready((logits2, loss2))
    ref_logits2, ref_loss2 = _reference(idx2, tgt2, model.token_embedding_table)
    assert logits2.shape == (B2 * T2, vocab_size)
    assert jnp.allclose(logits2, ref_logits2, atol=1e-5)
    assert jnp.allclose(loss2, ref_loss2, atol=1e-4)

    # --- targets=None path (returns (B, T, V) logits, loss None) ---
    logits3d, none_loss = model(idx, None)
    jax.block_until_ready(logits3d)
    assert logits3d.shape == (B, T, vocab_size)
    assert none_loss is None
    assert jnp.allclose(logits3d.reshape(B * T, vocab_size), ref_logits, atol=1e-5)

    print("KERNEL_OK")
</pallas_src>

<mosaic_0001>
module attributes {stable_mosaic.version = 11 : i64} {
  func.func @_bigram_train_kernel(%arg0: i32, %arg1: memref<16x1xi32, #tpu.memory_space<vmem>>, %arg2: memref<16x1xi32, #tpu.memory_space<vmem>>, %arg3: memref<128x128xf32, #tpu.memory_space<vmem>>, %arg4: memref<16x128xf32, #tpu.memory_space<vmem>>, %arg5: memref<16x1xf32, #tpu.memory_space<vmem>>) attributes {dimension_semantics = [#tpu.dimension_semantics<parallel>], iteration_bounds = array<i64: 1>, scalar_prefetch = 0 : i64, scratch_operands = 0 : i64, tpu.core_type = #tpu.core_type<tc>, window_params = [{transform_indices = @transform_0, window_bounds = array<i64: 16, 1>}, {transform_indices = @transform_1, window_bounds = array<i64: 16, 1>}, {pipeline_mode = #tpu.pipeline_mode<synchronous>, transform_indices = @transform_2, window_bounds = array<i64: 128, 128>}, {transform_indices = @transform_3, window_bounds = array<i64: 16, 128>}, {transform_indices = @transform_4, window_bounds = array<i64: 16, 1>}]} {
    %c0 = arith.constant 0 : index
    %c0_0 = arith.constant 0 : index
    %0 = vector.load %arg1[%c0, %c0_0] : memref<16x1xi32, #tpu.memory_space<vmem>>, vector<16x1xi32>
    %c0_1 = arith.constant 0 : index
    %c0_2 = arith.constant 0 : index
    %1 = vector.load %arg2[%c0_1, %c0_2] : memref<16x1xi32, #tpu.memory_space<vmem>>, vector<16x1xi32>
    %c0_3 = arith.constant 0 : index
    %c0_4 = arith.constant 0 : index
    %2 = vector.load %arg3[%c0_3, %c0_4] : memref<128x128xf32, #tpu.memory_space<vmem>>, vector<128x128xf32>
    %3 = tpu.iota {dimensions = array<i32: 1>} : vector<16x128xi32>
    %4 = vector.broadcast %0 : vector<16x1xi32> to vector<16x128xi32>
    %5 = arith.cmpi eq, %3, %4 : vector<16x128xi32>
    %6 = arith.extui %5 : vector<16x128xi1> to vector<16x128xi32>
    %7 = arith.sitofp %6 : vector<16x128xi32> to vector<16x128xf32>
    %cst = arith.constant dense<0.000000e+00> : vector<16x128xf32>
    %8 = tpu.matmul %7, %2, %cst {dimension_numbers = #tpu.dot_dimension_numbers<[1], [0], [0], [1], [0, 0, 1, 1], [], []>} : vector<16x128xf32>, vector<128x128xf32>, vector<16x128xf32> -> vector<16x128xf32>
    %c0_5 = arith.constant 0 : index
    %c0_6 = arith.constant 0 : index
    %9 = vector.load %arg4[%c0_5, %c0_6] : memref<16x128xf32, #tpu.memory_space<vmem>>, vector<16x128xf32>
    tpu.vector_store %arg4[%c0_5, %c0_6], %8 {strides = array<i32>} : memref<16x128xf32, #tpu.memory_space<vmem>>, vector<16x128xf32>,
    %c65_i32 = arith.constant 65 : i32
    %10 = vector.broadcast %c65_i32 : i32 to vector<16x128xi32>
    %11 = arith.cmpi slt, %3, %10 : vector<16x128xi32>
    %cst_7 = arith.constant -1.000000e+30 : f32
    %12 = vector.broadcast %cst_7 : f32 to vector<16x128xf32>
    %13 = arith.select %11, %8, %12 : vector<16x128xi1>, vector<16x128xf32>
    %cst_8 = arith.constant dense<0xFF800000> : vector<16xf32>
    %14 = vector.multi_reduction <maximumf>, %13, %cst_8 [1] : vector<16x128xf32> to vector<16xf32>
    %15 = vector.shape_cast %14 : vector<16xf32> to vector<16x1xf32>
    %16 = vector.broadcast %15 : vector<16x1xf32> to vector<16x128xf32>
    %17 = arith.subf %13, %16 : vector<16x128xf32>
    %18 = math.exp %17 : vector<16x128xf32>
    %cst_9 = arith.constant dense<0.000000e+00> : vector<16xf32>
    %19 = vector.multi_reduction <add>, %18, %cst_9 [1] : vector<16x128xf32> to vector<16xf32>
    %20 = vector.shape_cast %19 : vector<16xf32> to vector<16x1xf32>
    %21 = math.log %20 : vector<16x1xf32>
    %22 = vector.broadcast %1 : vector<16x1xi32> to vector<16x128xi32>
    %23 = arith.cmpi eq, %3, %22 : vector<16x128xi32>
    %cst_10 = arith.constant 0.000000e+00 : f32
    %24 = vector.broadcast %cst_10 : f32 to vector<16x128xf32>
    %25 = arith.select %23, %8, %24 : vector<16x128xi1>, vector<16x128xf32>
    %cst_11 = arith.constant dense<0.000000e+00> : vector<16xf32>
    %26 = vector.multi_reduction <add>, %25, %cst_11 [1] : vector<16x128xf32> to vector<16xf32>
    %27 = vector.shape_cast %26 : vector<16xf32> to vector<16x1xf32>
    %28 = arith.addf %15, %21 : vector<16x1xf32>
    %29 = arith.subf %28, %27 : vector<16x1xf32>
    %30 = tpu.iota {dimensions = array<i32: 0>} : vector<16x1xi32>
    %c16_i32 = arith.constant 16 : i32
    %31 = arith.muli %arg0, %c16_i32 : i32
    %32 = vector.broadcast %31 : i32 to vector<16x1xi32>
    %33 = arith.addi %30, %32 : vector<16x1xi32>
    %c16_i32_12 = arith.constant 16 : i32
    %34 = vector.broadcast %c16_i32_12 : i32 to vector<16x1xi32>
    %35 = arith.cmpi slt, %33, %34 : vector<16x1xi32>
    %cst_13 = arith.constant 0.000000e+00 : f32
    %36 = vector.broadcast %cst_13 : f32 to vector<16x1xf32>
    %37 = arith.select %35, %29, %36 : vector<16x1xi1>, vector<16x1xf32>
    %c0_14 = arith.constant 0 : index
    %c0_15 = arith.constant 0 : index
    %38 = vector.load %arg5[%c0_14, %c0_15] : memref<16x1xf32, #tpu.memory_space<vmem>>, vector<16x1xf32>
    tpu.vector_store %arg5[%c0_14, %c0_15], %37 {strides = array<i32>} : memref<16x1xf32, #tpu.memory_space<vmem>>, vector<16x1xf32>,
    return
  }
  func.func @transform_0(%arg0: i32) -> (i32, i32) {
    %c0_i32 = arith.constant 0 : i32
    %c0_i32_0 = arith.constant 0 : i32
    return %arg0, %c0_i32 : i32, i32
  }
  func.func @transform_1(%arg0: i32) -> (i32, i32) {
    %c0_i32 = arith.constant 0 : i32
    %c0_i32_0 = arith.constant 0 : i32
    return %arg0, %c0_i32 : i32, i32
  }
  func.func @transform_2(%arg0: i32) -> (i32, i32) {
    %c0_i32 = arith.constant 0 : i32
    %c0_i32_0 = arith.constant 0 : i32
    %c0_i32_1 = arith.constant 0 : i32
    return %c0_i32, %c0_i32_0 : i32, i32
  }
  func.func @transform_3(%arg0: i32) -> (i32, i32) {
    %c0_i32 = arith.constant 0 : i32
    %c0_i32_0 = arith.constant 0 : i32
    return %arg0, %c0_i32 : i32, i32
  }
  func.func @transform_4(%arg0: i32) -> (i32, i32) {
    %c0_i32 = arith.constant 0 : i32
    %c0_i32_0 = arith.constant 0 : i32
    return %arg0, %c0_i32 : i32, i32
  }
}

</mosaic_0001>

<llo_original>
// kernel: _bigram_train.1
$region0: #{_bigram_train.1}
  #allocation0 [shape = 'u32[]', space=smem, size = 0x4, offset = 0x4, fixed_abs, tag = 'smem constant byte address 0x4 - core index']
  #allocation1 [shape = 'u32[144,128]{1,0:T(1,128)}', space=vmem, size = 0x12000, scoped, tag = 'internal scratch']
  %s0 = inlined_call_operand.vmem [shape: s32[16,1], index: 0, kind: input, shape index: {}]
  %s1 = inlined_call_operand.vmem [shape: s32[16,1], index: 1, kind: input, shape index: {}]
  %s2 = inlined_call_operand.hbm [shape: f32[128,128], index: 2, kind: input, shape index: {}]
  %s3 = inlined_call_operand.hbm [shape: f32[16,128], index: 3, kind: output, shape index: {0}]
  %s4 = inlined_call_operand.vmem [shape: f32[16,1], index: 4, kind: output, shape index: {1}]
  %5 = xla_tuple %s3, %s4
  %s6 = sld [smem:[#allocation0]]
  $region34: #{_bigram_train.1} parent=0
    _
  %s8 = ssub.s32 1, %s6
  %s9 = scalar_select 0, %s8, %s6
  $region1: #{_bigram_train.1} parent=0
    #allocation2 [shape = 'u8[65536]{0}', space=vmem, size = 0x10000, scoped, tag = 'input window, operand 2, single buffered']
    #allocation3 [shape = 's32[1]{0}', space=sflag, size = 0x4, scoped, tag = 'scoped memory for _bigram_train.1']
    #allocation4 [shape = 's32[1]{0}', space=sflag, size = 0x4, scoped, tag = 'scoped memory for _bigram_train.1']
    #allocation5 [shape = 'u8[8192]{0}', space=vmem, size = 0x2000, scoped, tag = 'output window, operand 0, single buffered']
    %10 = vsyncpa [#allocation3], 0
    %11 = vsyncpa [#allocation4], 0
    // Predicated region
    $region2: #{_bigram_train.1} parent=1 // pred_check
      _
    $region3: #{_bigram_train.1} parent=1 // pred_check_branch
      %13 = sbr.rel (0) target = $region5
    $region4: #{_bigram_train.1} parent=1 // pred_region
      _
    $region5: #{_bigram_train.1} parent=1 // pred_fallthru
      _
    // Predicated region
    $region6: #{_bigram_train.1} parent=1 // pred_check
      _
    $region7: #{_bigram_train.1} parent=1 // pred_check_branch
      %15 = sbr.rel (0) target = $region9
    $region8: #{_bigram_train.1} parent=1 // pred_region
      _
    $region9: #{_bigram_train.1} parent=1 // pred_fallthru
      _
    // Predicated region
    $region10: #{_bigram_train.1} parent=1 // pred_check
      _
    $region11: #{_bigram_train.1} parent=1 // pred_check_branch
      %17 = sbr.rel (0) target = $region13
    $region12: #{_bigram_train.1} parent=1 // pred_region
      %s19 = ssub.s32 2048, 2048
      %20 = vsyncadd [#allocation3], %s19
      %s21 = sshll.u32 [#allocation2], 4
      %s22 = int_to_ptr.vmem [resolvable:$true] %s21
      %27 = dma.hbm_to_vmem [thread:$0]  %s2, 2048, %s22, [#allocation3], 128, 128, 8
    $region13: #{_bigram_train.1} parent=1 // pred_fallthru
      _
    // Predicated region
    $region14: #{_bigram_train.1} parent=1 // pred_check
      _
    $region15: #{_bigram_train.1} parent=1 // pred_check_branch
      %29 = sbr.rel (0) target = $region17
    $region16: #{_bigram_train.1} parent=1 // pred_region
      %30 = dma.done [#allocation3], 2048
    $region17: #{_bigram_train.1} parent=1 // pred_fallthru
      _
    %v31 = vld [vmem:[%s0] sm:$0xff]
    %v32 = vld [vmem:[%s0 + $0x8] sm:$0xff]
    %v33 = vld [vmem:[%s1] sm:$0xff]
    %v34 = vld [vmem:[%s1 + $0x8] sm:$0xff]
    %v35 = vld [vmem:[#allocation2] sm:$0xff]
    %v36 = vld [vmem:[#allocation2 + $0x8] sm:$0xff]
    %v37 = vld [vmem:[#allocation2 + $0x10] sm:$0xff]
    %v38 = vld [vmem:[#allocation2 + $0x18] sm:$0xff]
    %v39 = vld [vmem:[#allocation2 + $0x20] sm:$0xff]
    %v40 = vld [vmem:[#allocation2 + $0x28] sm:$0xff]
    %v41 = vld [vmem:[#allocation2 + $0x30] sm:$0xff]
    %v42 = vld [vmem:[#allocation2 + $0x38] sm:$0xff]
    %v43 = vld [vmem:[#allocation2 + $0x40] sm:$0xff]
    %v44 = vld [vmem:[#allocation2 + $0x48] sm:$0xff]
    %v45 = vld [vmem:[#allocation2 + $0x50] sm:$0xff]
    %v46 = vld [vmem:[#allocation2 + $0x58] sm:$0xff]
    %v47 = vld [vmem:[#allocation2 + $0x60] sm:$0xff]
    %v48 = vld [vmem:[#allocation2 + $0x68] sm:$0xff]
    %v49 = vld [vmem:[#allocation2 + $0x70] sm:$0xff]
    %v50 = vld [vmem:[#allocation2 + $0x78] sm:$0xff]
    %v51 = vlaneseq
    %v52 = vand.u32 %v51, 127
    %53 = vset.pattern.permute.xlu0 0
    %54 = vperm.xlu0 %53, %v31
    %v55 = vpop.permute.xlu0 %54
    %56 = vset.pattern.permute.xlu0 0
    %57 = vperm.xlu0 %56, %v32
    %v58 = vpop.permute.xlu0 %57
    %vm59 = vcmp.eq.s32.totalorder %v52, %v55
    %vm60 = vcmp.eq.s32.totalorder %v52, %v58
    %v61 = vsel %vm59, 1, 0
    %v62 = vsel %vm60, 1, 0
    %v63 = vcvt.s32.f32 %v61
    %v64 = vcvt.s32.f32 %v62
    %65 = vmatprep.subr.mxu0 0.0
    %66 = vmatpush1.msra.mxu0 %v35
    %67 = vmatprep.subr.mxu0 0.0
    %68 = vmatpush1.msra.mxu0 %v36
    %69 = vmatprep.subr.mxu0 0.0
    %70 = vmatpush1.msra.mxu0 %v37
    %71 = vmatprep.subr.mxu0 0.0
    %72 = vmatpush1.msra.mxu0 %v38
    %73 = vmatprep.subr.mxu0 0.0
    %74 = vmatpush1.msra.mxu0 %v39
    %75 = vmatprep.subr.mxu0 0.0
    %76 = vmatpush1.msra.mxu0 %v40
    %77 = vmatprep.subr.mxu0 0.0
    %78 = vmatpush1.msra.mxu0 %v41
    %79 = vmatprep.subr.mxu0 0.0
    %80 = vmatpush1.msra.mxu0 %v42
    %81 = vmatprep.subr.mxu0 0.0
    %82 = vmatpush1.msra.mxu0 %v43
    %83 = vmatprep.subr.mxu0 0.0
    %84 = vmatpush1.msra.mxu0 %v44
    %85 = vmatprep.subr.mxu0 0.0
    %86 = vmatpush1.msra.mxu0 %v45
    %87 = vmatprep.subr.mxu0 0.0
    %88 = vmatpush1.msra.mxu0 %v46
    %89 = vmatprep.subr.mxu0 0.0
    %90 = vmatpush1.msra.mxu0 %v47
    %91 = vmatprep.subr.mxu0 0.0
    %92 = vmatpush1.msra.mxu0 %v48
    %93 = vmatprep.subr.mxu0 0.0
    %94 = vmatpush1.msra.mxu0 %v49
    %95 = vmatprep.subr.mxu0 0.0
    %96 = vmatpush1.msra.mxu0 %v50
    %97 = vmatprep.subr.mxu0 0.0
    %98 = vmatpush1.msra.mxu0 0.0
    %99 = vmatprep.subr.mxu0 0.0
    %100 = vmatpush1.msra.mxu0 0.0
    %101 = vmatprep.subr.mxu0 0.0
    %102 = vmatpush1.msra.mxu0 0.0
    %103 = vmatprep.subr.mxu0 0.0
    %104 = vmatpush1.msra.mxu0 0.0
    %105 = vmatprep.subr.mxu0 0.0
    %106 = vmatpush1.msra.mxu0 0.0
    %107 = vmatprep.subr.mxu0 0.0
    %108 = vmatpush1.msra.mxu0 0.0
    %109 = vmatprep.subr.mxu0 0.0
    %110 = vmatpush1.msra.mxu0 0.0
    %111 = vmatprep.subr.mxu0 0.0
    %112 = vmatpush1.msra.mxu0 0.0
    %113 = vmatprep.subr.mxu0 0.0
    %114 = vmatpush1.msra.mxu0 0.0
    %115 = vmatprep.subr.mxu0 0.0
    %116 = vmatpush1.msra.mxu0 0.0
    %117 = vmatprep.subr.mxu0 0.0
    %118 = vmatpush1.msra.mxu0 0.0
    %119 = vmatprep.subr.mxu0 0.0
    %120 = vmatpush1.msra.mxu0 0.0
    %121 = vmatprep.subr.mxu0 0.0
    %122 = vmatpush1.msra.mxu0 0.0
    %123 = vmatprep.subr.mxu0 0.0
    %124 = vmatpush1.msra.mxu0 0.0
    %125 = vmatprep.subr.mxu0 0.0
    %126 = vmatpush1.msra.mxu0 0.0
    %127 = vmatprep.subr.mxu0 0.0
    %128 = vmatpush1.msra.mxu0 0.0
    %129 = vmatprep.mubr.f32.mxu0 0.0
    %130 = vmatmul.mubr.f32.gmra.mrb[0].mxu0 %v63
    %v131 = vpop.f32.mrb[0].mxu0
    %v132 = vadd.f32 0.0, %v131
    %v133 = vpop.f32.mrb[0].mxu0
    %134 = vmatprep.mubr.f32.mxu0 0.0
    %135 = vmatmul.mubr.f32.gmra.mrb[0].mxu0 %v64
    %v136 = vpop.f32.mrb[0].mxu0
    %v137 = vadd.f32 0.0, %v136
    %v138 = vpop.f32.mrb[0].mxu0
    %139 = vdwg.mxu0
    %140 = vst [vmem:[#allocation5] sm:$0xff] %v132
    %141 = vst [vmem:[#allocation5 + $0x8] sm:$0xff] %v137
    %vm142 = vcmp.lt.s32.totalorder %v52, 65
    %v143 = vsel %vm142, %v132, -1e+30
    %v144 = vsel %vm142, %v137, -1e+30
    %145 = vmax.xlane.f32.xlu0 %v143
    %v146 = vpop.xlane.xlu0 %145
    %147 = vmax.xlane.f32.xlu0 %v144
    %v148 = vpop.xlane.xlu0 %147
    %v149 = vsub.f32 %v143, %v146
    %v150 = vsub.f32 %v144, %v148
    %v151 = vmul.f32 %v149, 1.442695
    %v152 = vpow.pop %v151
    %v153 = vmul.f32 %v150, 1.442695
    %v154 = vpow.pop %v153
    %155 = vadd.xlane.f32.xlu0 %v152
    %v156 = vpop.xlane.xlu0 %155
    %157 = vadd.xlane.f32.xlu0 %v154
    %v158 = vpop.xlane.xlu0 %157
    %v159 = vlog2.pop %v156
    %v160 = vmul.f32 %v159, 0.6931472
    %v161 = vlog2.pop %v158
    %v162 = vmul.f32 %v161, 0.6931472
    %163 = vset.pattern.permute.xlu0 0
    %164 = vperm.xlu0 %163, %v33
    %v165 = vpop.permute.xlu0 %164
    %166 = vset.pattern.permute.xlu0 0
    %167 = vperm.xlu0 %166, %v34
    %v168 = vpop.permute.xlu0 %167
    %vm169 = vcmp.eq.s32.totalorder %v52, %v165
    %vm170 = vcmp.eq.s32.totalorder %v52, %v168
    %v171 = vsel %vm169, %v132, 0.0
    %v172 = vsel %vm170, %v137, 0.0
    %173 = vadd.xlane.f32.xlu0 %v171
    %v174 = vpop.xlane.xlu0 %173
    %175 = vadd.xlane.f32.xlu0 %v172
    %v176 = vpop.xlane.xlu0 %175
    %v177 = vadd.f32 %v146, %v160
    %v178 = vadd.f32 %v148, %v162
    %v179 = vsub.f32 %v177, %v174
    %v180 = vsub.f32 %v178, %v176
    %v181 = vlaneseq
    %v182 = vshrl.u32 %v181, 7
    %v183 = vadd.s32 %v182, 8
    %s184 = smul.u32 0, 16
    %v185 = vstv %s184
    %v186 = vadd.s32 %v182, %v185
    %v187 = vadd.s32 %v183, %v185
    %vm188 = vcmp.lt.s32.totalorder %v186, 16
    %vm189 = vcmp.lt.s32.totalorder %v187, 16
    %v190 = vsel %vm188, %v179, 0.0
    %v191 = vsel %vm189, %v180, 0.0
    %vm192 = vcmask 7168
    %193 = vst.msk [vmem:[%s4] sm:$0xff] %vm192, %v190
    %194 = vst.msk [vmem:[%s4 + $0x8] sm:$0xff] %vm192, %v191
    // Predicated region
    $region18: #{_bigram_train.1} parent=1 // pred_check
      _
    $region19: #{_bigram_train.1} parent=1 // pred_check_branch
      %196 = sbr.rel (0) target = $region21
    $region20: #{_bigram_train.1} parent=1 // pred_region
      %s198 = ssub.s32 256, 256
      %199 = vsyncadd [#allocation4], %s198
      %s200 = sshll.u32 [#allocation5], 4
      %s201 = int_to_ptr.vmem [resolvable:$true] %s200
      %206 = dma.vmem_to_hbm [thread:$0]  %s201, 256, %s3, [#allocation4], 128, 128, 8
    $region21: #{_bigram_train.1} parent=1 // pred_fallthru
      _
    // Predicated region
    $region22: #{_bigram_train.1} parent=1 // pred_check
      _
    $region23: #{_bigram_train.1} parent=1 // pred_check_branch
      %208 = sbr.rel (0) target = $region25
    $region24: #{_bigram_train.1} parent=1 // pred_region
      _
    $region25: #{_bigram_train.1} parent=1 // pred_fallthru
      _
    // Predicated region
    $region26: #{_bigram_train.1} parent=1 // pred_check
      _
    $region27: #{_bigram_train.1} parent=1 // pred_check_branch
      %210 = sbr.rel (0) target = $region29
    $region28: #{_bigram_train.1} parent=1 // pred_region
      %211 = dma.done [#allocation4], 256
    $region29: #{_bigram_train.1} parent=1 // pred_fallthru
      _
    // Predicated region
    $region30: #{_bigram_train.1} parent=1 // pred_check
      _
    $region31: #{_bigram_train.1} parent=1 // pred_check_branch
      %213 = sbr.rel (0) target = $region33
    $region32: #{_bigram_train.1} parent=1 // pred_region
      _
    $region33: #{_bigram_train.1} parent=1 // pred_fallthru
      _
    %214 = vsyncpa [#allocation3], 1
    %215 = vsyncpa [#allocation4], 1

</llo_original>
